<compile_context>
chip_gen: v7x
topology: tpu7x:2x2x1
jax: 0.10.0
libtpu: 0.0.40
codegen_flags: <defaults>
</compile_context>

<pallas_src>
import jax
import jax.numpy as jnp
from jax.experimental import pallas as pl
from jax.experimental.pallas import tpu as pltpu


def _round_up(x, m):
    return (x + m - 1) // m * m


def _choose_batch_tile(B, batch_tile):
    """Pick a batch tile that (a) amortizes per-grid-step overhead, (b) leaves at
    least 2 grid steps when there's enough work (v7x has 2 TensorCores), and
    (c) keeps padding to <= ~8 rows per grid step (instead of up to TB-1)."""
    min_steps = 2 if B >= 16 else 1
    steps = max(pl.cdiv(B, batch_tile), min_steps)
    return _round_up(pl.cdiv(B, steps), 8)


def critic_kernel(x_ref, w1_ref, b1_ref, w2_ref, b2_ref, w3_ref, b3_ref, v_ref):
    # x: [TB, ip] f32 (or bf16).  w1: [ip, H1] bf16, w2: [H1, H2] bf16, w3: [1, H2] f32.
    x = x_ref[...].astype(jnp.bfloat16)
    h1 = jnp.dot(x, w1_ref[...], preferred_element_type=jnp.float32) + b1_ref[...]
    h1 = jnp.maximum(h1, 0.0)                      # f32 epilogue on the VPU
    h2 = jnp.dot(h1.astype(jnp.bfloat16), w2_ref[...],
                 preferred_element_type=jnp.float32) + b2_ref[...]
    h2 = jnp.maximum(h2, 0.0)
    # Final layer (out dim == 1): VPU multiply + XLU lane reduce, not an N=1 MXU matmul.
    v = jnp.sum(h2 * w3_ref[...], axis=-1, keepdims=True) + b3_ref[...]
    v_ref[...] = v.astype(v_ref.dtype)


def critic_forward(state, params, *, batch_tile=2048):
    """state: [B, ip_dims] float32 (bf16 also accepted). Returns [B, 1] float32."""
    B, ip = state.shape
    w1, b1 = params["w1"], params["b1"]
    w2, b2 = params["w2"], params["b2"]
    w3, b3 = params["w3_row"], params["b3"]
    H1, H2 = w1.shape[1], w2.shape[1]

    TB = _choose_batch_tile(B, batch_tile)
    B_pad = _round_up(B, TB)
    if B_pad != B:
        # Pad is at most ~8 rows per grid step (tile is derived from B above), so this
        # copy is a sliver; it is skipped entirely when B is already tile-aligned.
        state = jnp.pad(state, ((0, B_pad - B), (0, 0)))
    grid = (B_pad // TB,)

    flops = 2 * B_pad * (ip * H1 + H1 * H2 + H2)
    bytes_accessed = (
        state.size * state.dtype.itemsize
        + sum(a.size * a.dtype.itemsize for a in (w1, b1, w2, b2, w3, b3))
        + B_pad * 4  # f32 output
    )

    const = lambda i: (0, 0)
    out = pl.pallas_call(
        critic_kernel,
        out_shape=jax.ShapeDtypeStruct((B_pad, 1), jnp.float32),
        grid=grid,
        in_specs=[
            pl.BlockSpec((TB, ip), lambda i: (i, 0)),   # state: tiled over batch
            pl.BlockSpec((ip, H1), const),              # weights/biases: VMEM-resident
            pl.BlockSpec((1, H1), const),
            pl.BlockSpec((H1, H2), const),
            pl.BlockSpec((1, H2), const),
            pl.BlockSpec((1, H2), const),
            pl.BlockSpec((1, 1), const),
        ],
        out_specs=pl.BlockSpec((TB, 1), lambda i: (i, 0)),
        compiler_params=pltpu.CompilerParams(
            dimension_semantics=("parallel",),          # split batch across TCs (v7x)
        ),
        cost_estimate=pl.CostEstimate(
            flops=flops, transcendentals=0, bytes_accessed=bytes_accessed),
    )(state, w1, b1, w2, b2, w3, b3)
    return out[:B]


def init_params(key, ip_dims, hl_1_dims=256, hl_2_dims=256):
    """PyTorch-style init U(-1/sqrt(fan_in), 1/sqrt(fan_in)).
    w1/w2 stored pre-transposed as [in, out] in bf16 (MXU input dtype);
    w3 stored as a dense f32 row [1, hl_2]; biases in f32 for f32 epilogues."""
    ks = jax.random.split(key, 6)

    def lin(kw, kb, fan_in, fan_out):
        bound = 1.0 / jnp.sqrt(jnp.float32(fan_in))
        w = jax.random.uniform(kw, (fan_in, fan_out), jnp.float32, -bound, bound)
        b = jax.random.uniform(kb, (1, fan_out), jnp.float32, -bound, bound)
        return w, b

    w1, b1 = lin(ks[0], ks[1], ip_dims, hl_1_dims)
    w2, b2 = lin(ks[2], ks[3], hl_1_dims, hl_2_dims)
    w3, b3 = lin(ks[4], ks[5], hl_2_dims, 1)
    return {
        "w1": w1.astype(jnp.bfloat16), "b1": b1,
        "w2": w2.astype(jnp.bfloat16), "b2": b2,
        "w3_row": w3.reshape(1, hl_2_dims),   # [1, H2] row for VPU mul + reduce
        "b3": b3.reshape(1, 1),
    }


# TODO(synk): Adam optimizer / training step from the PyTorch module is out of scope
# (forward pass only).

if __name__ == "__main__":
    key = jax.random.PRNGKey(0)
    k_state, k_params = jax.random.split(key)

    B, ip_dims = 4, 32
    hl_1_dims, hl_2_dims = 256, 256

    state = jax.random.normal(k_state, (B, ip_dims), jnp.float32)
    params = init_params(k_params, ip_dims, hl_1_dims, hl_2_dims)

    v = critic_forward(state, params)
    v = jax.block_until_ready(v)

    # Pure-JAX reference doing the identical computation (bf16 MXU inputs, f32 accum).
    def ref(x, p):
        h1 = jnp.dot(x.astype(jnp.bfloat16), p["w1"],
                     preferred_element_type=jnp.float32) + p["b1"]
        h1 = jnp.maximum(h1, 0.0)
        h2 = jnp.dot(h1.astype(jnp.bfloat16), p["w2"],
                     preferred_element_type=jnp.float32) + p["b2"]
        h2 = jnp.maximum(h2, 0.0)
        return jnp.sum(h2 * p["w3_row"], axis=-1, keepdims=True) + p["b3"]

    expected = ref(state, params)
    assert v.shape == (B, 1), v.shape
    assert jnp.allclose(v, expected, atol=2e-3, rtol=2e-3), (v, expected)

    # Also exercise a multi-step grid (forces >=2 tiles and a ragged, minimally
    # padded tail) to cover the tiled path.
    B2 = 300
    state2 = jax.random.normal(jax.random.PRNGKey(1), (B2, ip_dims), jnp.float32)
    v2 = jax.block_until_ready(critic_forward(state2, params))
    assert v2.shape == (B2, 1), v2.shape
    assert jnp.allclose(v2, ref(state2, params), atol=2e-3, rtol=2e-3)

    print("KERNEL_OK")
</pallas_src>

<mosaic_0001>
module attributes {stable_mosaic.version = 11 : i64} {
  func.func @critic_kernel(%arg0: i32, %arg1: memref<8x32xf32, #tpu.memory_space<vmem>>, %arg2: memref<32x256xbf16, #tpu.memory_space<vmem>>, %arg3: memref<1x256xf32, #tpu.memory_space<vmem>>, %arg4: memref<256x256xbf16, #tpu.memory_space<vmem>>, %arg5: memref<1x256xf32, #tpu.memory_space<vmem>>, %arg6: memref<1x256xf32, #tpu.memory_space<vmem>>, %arg7: memref<1x1xf32, #tpu.memory_space<vmem>>, %arg8: memref<8x1xf32, #tpu.memory_space<vmem>>) attributes {dimension_semantics = [#tpu.dimension_semantics<parallel>], iteration_bounds = array<i64: 1>, scalar_prefetch = 0 : i64, scratch_operands = 0 : i64, tpu.core_type = #tpu.core_type<tc>, window_params = [{transform_indices = @transform_0, window_bounds = array<i64: 8, 32>}, {pipeline_mode = #tpu.pipeline_mode<synchronous>, transform_indices = @transform_1, window_bounds = array<i64: 32, 256>}, {pipeline_mode = #tpu.pipeline_mode<synchronous>, transform_indices = @transform_2, window_bounds = array<i64: 1, 256>}, {pipeline_mode = #tpu.pipeline_mode<synchronous>, transform_indices = @transform_3, window_bounds = array<i64: 256, 256>}, {pipeline_mode = #tpu.pipeline_mode<synchronous>, transform_indices = @transform_4, window_bounds = array<i64: 1, 256>}, {pipeline_mode = #tpu.pipeline_mode<synchronous>, transform_indices = @transform_5, window_bounds = array<i64: 1, 256>}, {pipeline_mode = #tpu.pipeline_mode<synchronous>, transform_indices = @transform_6, window_bounds = array<i64: 1, 1>}, {transform_indices = @transform_7, window_bounds = array<i64: 8, 1>}]} {
    %c0 = arith.constant 0 : index
    %c0_0 = arith.constant 0 : index
    %0 = vector.load %arg1[%c0, %c0_0] : memref<8x32xf32, #tpu.memory_space<vmem>>, vector<8x32xf32>
    %1 = arith.truncf %0 : vector<8x32xf32> to vector<8x32xbf16>
    %c0_1 = arith.constant 0 : index
    %c0_2 = arith.constant 0 : index
    %2 = vector.load %arg2[%c0_1, %c0_2] : memref<32x256xbf16, #tpu.memory_space<vmem>>, vector<32x256xbf16>
    %cst = arith.constant dense<0.000000e+00> : vector<8x256xf32>
    %3 = tpu.matmul %1, %2, %cst {dimension_numbers = #tpu.dot_dimension_numbers<[1], [0], [0], [1], [0, 0, 1, 1], [], []>} : vector<8x32xbf16>, vector<32x256xbf16>, vector<8x256xf32> -> vector<8x256xf32>
    %c0_3 = arith.constant 0 : index
    %c0_4 = arith.constant 0 : index
    %4 = vector.load %arg3[%c0_3, %c0_4] : memref<1x256xf32, #tpu.memory_space<vmem>>, vector<1x256xf32>
    %5 = vector.broadcast %4 : vector<1x256xf32> to vector<8x256xf32>
    %6 = arith.addf %3, %5 : vector<8x256xf32>
    %cst_5 = arith.constant 0.000000e+00 : f32
    %7 = vector.broadcast %cst_5 : f32 to vector<8x256xf32>
    %8 = arith.maximumf %6, %7 : vector<8x256xf32>
    %9 = arith.truncf %8 : vector<8x256xf32> to vector<8x256xbf16>
    %c0_6 = arith.constant 0 : index
    %c0_7 = arith.constant 0 : index
    %10 = vector.load %arg4[%c0_6, %c0_7] : memref<256x256xbf16, #tpu.memory_space<vmem>>, vector<256x256xbf16>
    %cst_8 = arith.constant dense<0.000000e+00> : vector<8x256xf32>
    %11 = tpu.matmul %9, %10, %cst_8 {dimension_numbers = #tpu.dot_dimension_numbers<[1], [0], [0], [1], [0, 0, 1, 1], [], []>} : vector<8x256xbf16>, vector<256x256xbf16>, vector<8x256xf32> -> vector<8x256xf32>
    %c0_9 = arith.constant 0 : index
    %c0_10 = arith.constant 0 : index
    %12 = vector.load %arg5[%c0_9, %c0_10] : memref<1x256xf32, #tpu.memory_space<vmem>>, vector<1x256xf32>
    %13 = vector.broadcast %12 : vector<1x256xf32> to vector<8x256xf32>
    %14 = arith.addf %11, %13 : vector<8x256xf32>
    %cst_11 = arith.constant 0.000000e+00 : f32
    %15 = vector.broadcast %cst_11 : f32 to vector<8x256xf32>
    %16 = arith.maximumf %14, %15 : vector<8x256xf32>
    %c0_12 = arith.constant 0 : index
    %c0_13 = arith.constant 0 : index
    %17 = vector.load %arg6[%c0_12, %c0_13] : memref<1x256xf32, #tpu.memory_space<vmem>>, vector<1x256xf32>
    %18 = vector.broadcast %17 : vector<1x256xf32> to vector<8x256xf32>
    %19 = arith.mulf %16, %18 : vector<8x256xf32>
    %cst_14 = arith.constant dense<0.000000e+00> : vector<8xf32>
    %20 = vector.multi_reduction <add>, %19, %cst_14 [1] : vector<8x256xf32> to vector<8xf32>
    %21 = vector.shape_cast %20 : vector<8xf32> to vector<8x1xf32>
    %c0_15 = arith.constant 0 : index
    %c0_16 = arith.constant 0 : index
    %22 = vector.load %arg7[%c0_15, %c0_16] : memref<1x1xf32, #tpu.memory_space<vmem>>, vector<1x1xf32>
    %23 = vector.broadcast %22 : vector<1x1xf32> to vector<8x1xf32>
    %24 = arith.addf %21, %23 : vector<8x1xf32>
    %c0_17 = arith.constant 0 : index
    %c0_18 = arith.constant 0 : index
    %25 = vector.load %arg8[%c0_17, %c0_18] : memref<8x1xf32, #tpu.memory_space<vmem>>, vector<8x1xf32>
    tpu.vector_store %arg8[%c0_17, %c0_18], %24 {strides = array<i32>} : memref<8x1xf32, #tpu.memory_space<vmem>>, vector<8x1xf32>,
    return
  }
  func.func @transform_0(%arg0: i32) -> (i32, i32) {
    %c0_i32 = arith.constant 0 : i32
    %c0_i32_0 = arith.constant 0 : i32
    return %arg0, %c0_i32 : i32, i32
  }
  func.func @transform_1(%arg0: i32) -> (i32, i32) {
    %c0_i32 = arith.constant 0 : i32
    %c0_i32_0 = arith.constant 0 : i32
    %c0_i32_1 = arith.constant 0 : i32
    return %c0_i32, %c0_i32_0 : i32, i32
  }
  func.func @transform_2(%arg0: i32) -> (i32, i32) {
    %c0_i32 = arith.constant 0 : i32
    %c0_i32_0 = arith.constant 0 : i32
    %c0_i32_1 = arith.constant 0 : i32
    return %c0_i32, %c0_i32_0 : i32, i32
  }
  func.func @transform_3(%arg0: i32) -> (i32, i32) {
    %c0_i32 = arith.constant 0 : i32
    %c0_i32_0 = arith.constant 0 : i32
    %c0_i32_1 = arith.constant 0 : i32
    return %c0_i32, %c0_i32_0 : i32, i32
  }
  func.func @transform_4(%arg0: i32) -> (i32, i32) {
    %c0_i32 = arith.constant 0 : i32
    %c0_i32_0 = arith.constant 0 : i32
    %c0_i32_1 = arith.constant 0 : i32
    return %c0_i32, %c0_i32_0 : i32, i32
  }
  func.func @transform_5(%arg0: i32) -> (i32, i32) {
    %c0_i32 = arith.constant 0 : i32
    %c0_i32_0 = arith.constant 0 : i32
    %c0_i32_1 = arith.constant 0 : i32
    return %c0_i32, %c0_i32_0 : i32, i32
  }
  func.func @transform_6(%arg0: i32) -> (i32, i32) {
    %c0_i32 = arith.constant 0 : i32
    %c0_i32_0 = arith.constant 0 : i32
    %c0_i32_1 = arith.constant 0 : i32
    return %c0_i32, %c0_i32_0 : i32, i32
  }
  func.func @transform_7(%arg0: i32) -> (i32, i32) {
    %c0_i32 = arith.constant 0 : i32
    %c0_i32_0 = arith.constant 0 : i32
    return %arg0, %c0_i32 : i32, i32
  }
}

</mosaic_0001>

<llo_original>
// kernel: tpu_custom_call.1
$region0: #{tpu_custom_call.1}
  #allocation0 [shape = 'u32[]', space=smem, size = 0x4, offset = 0x4, fixed_abs, tag = 'smem constant byte address 0x4 - core index']
  #allocation1 [shape = 'u32[144,128]{1,0:T(1,128)}', space=vmem, size = 0x12000, scoped, tag = 'internal scratch']
  #allocation2 [shape = 'f32[1,1]{1,0:T(1,128)S(1)}', space=vmem, size = 0x200, scoped, tag = 'scoped memory for tpu_custom_call.1']
  %s0 = inlined_call_operand.hbm [shape: f32[8,32], index: 0, kind: input, shape index: {}]
  %s1 = inlined_call_operand.hbm [shape: bf16[32,256], index: 1, kind: input, shape index: {}]
  %s2 = inlined_call_operand.vmem [shape: f32[1,256], index: 2, kind: input, shape index: {}]
  %s3 = inlined_call_operand.hbm [shape: bf16[256,256], index: 3, kind: input, shape index: {}]
  %s4 = inlined_call_operand.vmem [shape: f32[1,256], index: 4, kind: input, shape index: {}]
  %s5 = inlined_call_operand.vmem [shape: f32[1,256], index: 5, kind: input, shape index: {}]
  %s6 = inlined_call_operand.<no memory space> [shape: f32[1,1], index: 6, kind: input, shape index: {}]
  %s7 = inlined_call_operand.vmem [shape: f32[8,1], index: 7, kind: output, shape index: {}]
  %s8 = sld [smem:[#allocation0]]
  $region50: #{tpu_custom_call.1} parent=0
    _
  %s10 = ssub.s32 1, %s8
  %s11 = scalar_select 0, %s10, %s8
  %v12 = vstv %s6
  %13 = vst [vmem:[#allocation2] sm:$0x1] %v12
  $region1: #{tpu_custom_call.1} parent=0
    #allocation3 [shape = 'u8[4096]{0}', space=vmem, size = 0x1000, scoped, tag = 'input window, operand 0, single buffered']
    #allocation4 [shape = 's32[1]{0}', space=sflag, size = 0x4, scoped, tag = 'scoped memory for tpu_custom_call.1']
    #allocation5 [shape = 'u8[16384]{0}', space=vmem, size = 0x4000, scoped, tag = 'input window, operand 1, single buffered']
    #allocation6 [shape = 's32[1]{0}', space=sflag, size = 0x4, scoped, tag = 'scoped memory for tpu_custom_call.1']
    #allocation7 [shape = 'u8[131072]{0}', space=vmem, size = 0x20000, scoped, tag = 'input window, operand 3, single buffered']
    %14 = vsyncpa [#allocation4], 0
    %15 = vsyncpa [#allocation6], 0
    // Predicated region
    $region2: #{tpu_custom_call.1} parent=1 // pred_check
      _
    $region3: #{tpu_custom_call.1} parent=1 // pred_check_branch
      %17 = sbr.rel (0) target = $region5
    $region4: #{tpu_custom_call.1} parent=1 // pred_region
      %s19 = ssub.s32 128, 128
      %20 = vsyncadd [#allocation4], %s19
      %s22 = sshll.u32 [#allocation3], 4
      %s23 = int_to_ptr.vmem [resolvable:$true] %s22
      %25 = dma.hbm_to_vmem [thread:$0]  %s0, 128, %s23, [#allocation4]
    $region5: #{tpu_custom_call.1} parent=1 // pred_fallthru
      _
    // Predicated region
    $region6: #{tpu_custom_call.1} parent=1 // pred_check
      _
    $region7: #{tpu_custom_call.1} parent=1 // pred_check_branch
      %27 = sbr.rel (0) target = $region9
    $region8: #{tpu_custom_call.1} parent=1 // pred_region
      %s29 = ssub.s32 512, 512
      %30 = vsyncadd [#allocation6], %s29
      %s31 = sshll.u32 [#allocation5], 4
      %s32 = int_to_ptr.vmem [resolvable:$true] %s31
      %37 = dma.hbm_to_vmem [thread:$0]  %s1, 512, %s32, [#allocation6], 128, 128, 8
    $region9: #{tpu_custom_call.1} parent=1 // pred_fallthru
      _
    // Predicated region
    $region10: #{tpu_custom_call.1} parent=1 // pred_check
      _
    $region11: #{tpu_custom_call.1} parent=1 // pred_check_branch
      %39 = sbr.rel (0) target = $region13
    $region12: #{tpu_custom_call.1} parent=1 // pred_region
      _
    $region13: #{tpu_custom_call.1} parent=1 // pred_fallthru
      _
    // Predicated region
    $region14: #{tpu_custom_call.1} parent=1 // pred_check
      _
    $region15: #{tpu_custom_call.1} parent=1 // pred_check_branch
      %41 = sbr.rel (0) target = $region17
    $region16: #{tpu_custom_call.1} parent=1 // pred_region
      %s43 = ssub.s32 4096, 4096
      %44 = vsyncadd [#allocation6], %s43
      %s45 = sshll.u32 [#allocation7], 4
      %s46 = int_to_ptr.vmem [resolvable:$true] %s45
      %51 = dma.hbm_to_vmem [thread:$0]  %s3, 4096, %s46, [#allocation6], 128, 128, 8
    $region17: #{tpu_custom_call.1} parent=1 // pred_fallthru
      _
    // Predicated region
    $region18: #{tpu_custom_call.1} parent=1 // pred_check
      _
    $region19: #{tpu_custom_call.1} parent=1 // pred_check_branch
      %53 = sbr.rel (0) target = $region21
    $region20: #{tpu_custom_call.1} parent=1 // pred_region
      _
    $region21: #{tpu_custom_call.1} parent=1 // pred_fallthru
      _
    // Predicated region
    $region22: #{tpu_custom_call.1} parent=1 // pred_check
      _
    $region23: #{tpu_custom_call.1} parent=1 // pred_check_branch
      %55 = sbr.rel (0) target = $region25
    $region24: #{tpu_custom_call.1} parent=1 // pred_region
      _
    $region25: #{tpu_custom_call.1} parent=1 // pred_fallthru
      _
    // Predicated region
    $region26: #{tpu_custom_call.1} parent=1 // pred_check
      _
    $region27: #{tpu_custom_call.1} parent=1 // pred_check_branch
      %57 = sbr.rel (0) target = $region29
    $region28: #{tpu_custom_call.1} parent=1 // pred_region
      _
    $region29: #{tpu_custom_call.1} parent=1 // pred_fallthru
      _
    // Predicated region
    $region30: #{tpu_custom_call.1} parent=1 // pred_check
      _
    $region31: #{tpu_custom_call.1} parent=1 // pred_check_branch
      %59 = sbr.rel (0) target = $region33
    $region32: #{tpu_custom_call.1} parent=1 // pred_region
      %60 = dma.done [#allocation4], 128
    $region33: #{tpu_custom_call.1} parent=1 // pred_fallthru
      _
    // Predicated region
    $region34: #{tpu_custom_call.1} parent=1 // pred_check
      _
    $region35: #{tpu_custom_call.1} parent=1 // pred_check_branch
      %62 = sbr.rel (0) target = $region37
    $region36: #{tpu_custom_call.1} parent=1 // pred_region
      %63 = dma.done [#allocation6], 512
    $region37: #{tpu_custom_call.1} parent=1 // pred_fallthru
      _
    // Predicated region
    $region38: #{tpu_custom_call.1} parent=1 // pred_check
      _
    $region39: #{tpu_custom_call.1} parent=1 // pred_check_branch
      %65 = sbr.rel (0) target = $region41
    $region40: #{tpu_custom_call.1} parent=1 // pred_region
      %66 = dma.done [#allocation6], 4096
    $region41: #{tpu_custom_call.1} parent=1 // pred_fallthru
      _
    %v68 = vld [vmem:[#allocation3] sm:$0xff]
    %v69 = vpack.c.bf16 %v68, %v68
    %v70 = vld [vmem:[#allocation5] sm:$0xff]
    %v71 = vld [vmem:[#allocation5 + $0x8] sm:$0xff]
    %v72 = vld [vmem:[#allocation5 + $0x10] sm:$0xff]
    %v73 = vld [vmem:[#allocation5 + $0x18] sm:$0xff]
    %v74 = vld [vmem:[%s2] sm:$0x3]
    %v76 = vlaneseq
    %v77 = vshrl.u32 %v76, 7
    %v78 = vsub.s32 0, %v77
    %v79 = vrot.slane %v74, %v78
    %v80 = vlaneseq
    %v81 = vshrl.u32 %v80, 7
    %v82 = vsub.s32 1, %v81
    %v83 = vrot.slane %v74, %v82
    %v90 = vunpack.c.l.b16 %v70
    %v91 = vunpack.c.h.b16 %v70
    %v92 = vunpack.c.l.b16 %v71
    %v93 = vunpack.c.h.b16 %v71
    %v94 = vunpack.c.l.b16 %v72
    %v95 = vunpack.c.h.b16 %v72
    %v96 = vunpack.c.l.b16 %v73
    %v97 = vunpack.c.h.b16 %v73
    %v98 = vpack.c.b16 %v92, %v90
    %v99 = vpack.c.b16 %v93, %v91
    %v100 = vpack.c.b16 %v96, %v94
    %v101 = vpack.c.b16 %v97, %v95
    %vm106 = vcmask 261120
    %v108 = vsel %vm106, %v69, 0
    %110 = vmatprep.subr.bf16.mxu0 %v99
    %111 = vmatpush1.bf16.msra.mxu0 %v98
    %112 = vmatprep.subr.bf16.mxu0 %v101
    %113 = vmatpush1.bf16.msra.mxu0 %v100
    %114 = vmatprep.subr.bf16.mxu0 0
    %115 = vmatpush1.bf16.msra.mxu0 0
    %116 = vmatprep.subr.bf16.mxu0 0
    %117 = vmatpush1.bf16.msra.mxu0 0
    %118 = vmatprep.subr.bf16.mxu0 0
    %119 = vmatpush1.bf16.msra.mxu0 0
    %120 = vmatprep.subr.bf16.mxu0 0
    %121 = vmatpush1.bf16.msra.mxu0 0
    %122 = vmatprep.subr.bf16.mxu0 0
    %123 = vmatpush1.bf16.msra.mxu0 0
    %124 = vmatprep.subr.bf16.mxu0 0
    %125 = vmatpush1.bf16.msra.mxu0 0
    %126 = vmatprep.subr.bf16.mxu0 0
    %127 = vmatpush1.bf16.msra.mxu0 0
    %128 = vmatprep.subr.bf16.mxu0 0
    %129 = vmatpush1.bf16.msra.mxu0 0
    %130 = vmatprep.subr.bf16.mxu0 0
    %131 = vmatpush1.bf16.msra.mxu0 0
    %132 = vmatprep.subr.bf16.mxu0 0
    %133 = vmatpush1.bf16.msra.mxu0 0
    %134 = vmatprep.subr.bf16.mxu0 0
    %135 = vmatpush1.bf16.msra.mxu0 0
    %136 = vmatprep.subr.bf16.mxu0 0
    %137 = vmatpush1.bf16.msra.mxu0 0
    %138 = vmatprep.subr.bf16.mxu0 0
    %139 = vmatpush1.bf16.msra.mxu0 0
    %140 = vmatprep.subr.bf16.mxu0 0
    %141 = vmatpush1.bf16.msra.mxu0 0
    %142 = vmatprep.mubr.bf16.mxu0 0
    %143 = vmatmul.mubr.bf16.gmra.mrb[0].mxu0 %v108
    %v144 = vpop.f32.mrb[0].mxu0
    %v145 = vadd.f32 %v79, %v144
    %v146 = vpop.f32.mrb[0].mxu0
    %v147 = vadd.f32 %v83, %v146
    %v148 = vpop.f32.mrb[0].mxu0
    %v149 = vpop.f32.mrb[0].mxu0
    %150 = vdwg.mxu0
    %v151 = vmax.f32 %v145, 0.0
    %v152 = vmax.f32 %v147, 0.0
    %v153 = vpack.c.bf16 %v151, %v151
    %v154 = vpack.c.bf16 %v152, %v152
    %v155 = vld [vmem:[#allocation7] sm:$0xff]
    %v156 = vld [vmem:[#allocation7 + $0x8] sm:$0xff]
    %v157 = vld [vmem:[#allocation7 + $0x10] sm:$0xff]
    %v158 = vld [vmem:[#allocation7 + $0x18] sm:$0xff]
    %v159 = vld [vmem:[#allocation7 + $0x20] sm:$0xff]
    %v160 = vld [vmem:[#allocation7 + $0x28] sm:$0xff]
    %v161 = vld [vmem:[#allocation7 + $0x30] sm:$0xff]
    %v162 = vld [vmem:[#allocation7 + $0x38] sm:$0xff]
    %v163 = vld [vmem:[#allocation7 + $0x40] sm:$0xff]
    %v164 = vld [vmem:[#allocation7 + $0x48] sm:$0xff]
    %v165 = vld [vmem:[#allocation7 + $0x50] sm:$0xff]
    %v166 = vld [vmem:[#allocation7 + $0x58] sm:$0xff]
    %v167 = vld [vmem:[#allocation7 + $0x60] sm:$0xff]
    %v168 = vld [vmem:[#allocation7 + $0x68] sm:$0xff]
    %v169 = vld [vmem:[#allocation7 + $0x70] sm:$0xff]
    %v170 = vld [vmem:[#allocation7 + $0x78] sm:$0xff]
    %v171 = vld [vmem:[#allocation7 + $0x80] sm:$0xff]
    %v172 = vld [vmem:[#allocation7 + $0x88] sm:$0xff]
    %v173 = vld [vmem:[#allocation7 + $0x90] sm:$0xff]
    %v174 = vld [vmem:[#allocation7 + $0x98] sm:$0xff]
    %v175 = vld [vmem:[#allocation7 + $0xa0] sm:$0xff]
    %v176 = vld [vmem:[#allocation7 + $0xa8] sm:$0xff]
    %v177 = vld [vmem:[#allocation7 + $0xb0] sm:$0xff]
    %v178 = vld [vmem:[#allocation7 + $0xb8] sm:$0xff]
    %v179 = vld [vmem:[#allocation7 + $0xc0] sm:$0xff]
    %v180 = vld [vmem:[#allocation7 + $0xc8] sm:$0xff]
    %v181 = vld [vmem:[#allocation7 + $0xd0] sm:$0xff]
    %v182 = vld [vmem:[#allocation7 + $0xd8] sm:$0xff]
    %v183 = vld [vmem:[#allocation7 + $0xe0] sm:$0xff]
    %v184 = vld [vmem:[#allocation7 + $0xe8] sm:$0xff]
    %v185 = vld [vmem:[#allocation7 + $0xf0] sm:$0xff]
    %v186 = vld [vmem:[#allocation7 + $0xf8] sm:$0xff]
    %v187 = vld [vmem:[%s4] sm:$0x3]
    %v189 = vlaneseq
    %v190 = vshrl.u32 %v189, 7
    %v191 = vsub.s32 0, %v190
    %v192 = vrot.slane %v187, %v191
    %v193 = vlaneseq
    %v194 = vshrl.u32 %v193, 7
    %v195 = vsub.s32 1, %v194
    %v196 = vrot.slane %v187, %v195
    %v231 = vunpack.c.l.b16 %v155
    %v232 = vunpack.c.h.b16 %v155
    %v233 = vunpack.c.l.b16 %v156
    %v234 = vunpack.c.h.b16 %v156
    %v235 = vunpack.c.l.b16 %v157
    %v236 = vunpack.c.h.b16 %v157
    %v237 = vunpack.c.l.b16 %v158
    %v238 = vunpack.c.h.b16 %v158
    %v239 = vunpack.c.l.b16 %v159
    %v240 = vunpack.c.h.b16 %v159
    %v241 = vunpack.c.l.b16 %v160
    %v242 = vunpack.c.h.b16 %v160
    %v243 = vunpack.c.l.b16 %v161
    %v244 = vunpack.c.h.b16 %v161
    %v245 = vunpack.c.l.b16 %v162
    %v246 = vunpack.c.h.b16 %v162
    %v247 = vunpack.c.l.b16 %v163
    %v248 = vunpack.c.h.b16 %v163
    %v249 = vunpack.c.l.b16 %v164
    %v250 = vunpack.c.h.b16 %v164
    %v251 = vunpack.c.l.b16 %v165
    %v252 = vunpack.c.h.b16 %v165
    %v253 = vunpack.c.l.b16 %v166
    %v254 = vunpack.c.h.b16 %v166
    %v255 = vunpack.c.l.b16 %v167
    %v256 = vunpack.c.h.b16 %v167
    %v257 = vunpack.c.l.b16 %v168
    %v258 = vunpack.c.h.b16 %v168
    %v259 = vunpack.c.l.b16 %v169
    %v260 = vunpack.c.h.b16 %v169
    %v261 = vunpack.c.l.b16 %v170
    %v262 = vunpack.c.h.b16 %v170
    %v263 = vunpack.c.l.b16 %v171
    %v264 = vunpack.c.h.b16 %v171
    %v265 = vunpack.c.l.b16 %v172
    %v266 = vunpack.c.h.b16 %v172
    %v267 = vunpack.c.l.b16 %v173
    %v268 = vunpack.c.h.b16 %v173
    %v269 = vunpack.c.l.b16 %v174
    %v270 = vunpack.c.h.b16 %v174
    %v271 = vunpack.c.l.b16 %v175
    %v272 = vunpack.c.h.b16 %v175
    %v273 = vunpack.c.l.b16 %v176
    %v274 = vunpack.c.h.b16 %v176
    %v275 = vunpack.c.l.b16 %v177
    %v276 = vunpack.c.h.b16 %v177
    %v277 = vunpack.c.l.b16 %v178
    %v278 = vunpack.c.h.b16 %v178
    %v279 = vunpack.c.l.b16 %v179
    %v280 = vunpack.c.h.b16 %v179
    %v281 = vunpack.c.l.b16 %v180
    %v282 = vunpack.c.h.b16 %v180
    %v283 = vunpack.c.l.b16 %v181
    %v284 = vunpack.c.h.b16 %v181
    %v285 = vunpack.c.l.b16 %v182
    %v286 = vunpack.c.h.b16 %v182
    %v287 = vunpack.c.l.b16 %v183
    %v288 = vunpack.c.h.b16 %v183
    %v289 = vunpack.c.l.b16 %v184
    %v290 = vunpack.c.h.b16 %v184
    %v291 = vunpack.c.l.b16 %v185
    %v292 = vunpack.c.h.b16 %v185
    %v293 = vunpack.c.l.b16 %v186
    %v294 = vunpack.c.h.b16 %v186
    %v295 = vpack.c.b16 %v233, %v231
    %v296 = vpack.c.b16 %v234, %v232
    %v297 = vpack.c.b16 %v237, %v235
    %v298 = vpack.c.b16 %v238, %v236
    %v299 = vpack.c.b16 %v241, %v239
    %v300 = vpack.c.b16 %v242, %v240
    %v301 = vpack.c.b16 %v245, %v243
    %v302 = vpack.c.b16 %v246, %v244
    %v303 = vpack.c.b16 %v249, %v247
    %v304 = vpack.c.b16 %v250, %v248
    %v305 = vpack.c.b16 %v253, %v251
    %v306 = vpack.c.b16 %v254, %v252
    %v307 = vpack.c.b16 %v257, %v255
    %v308 = vpack.c.b16 %v258, %v256
    %v309 = vpack.c.b16 %v261, %v259
    %v310 = vpack.c.b16 %v262, %v260
    %v311 = vpack.c.b16 %v265, %v263
    %v312 = vpack.c.b16 %v266, %v264
    %v313 = vpack.c.b16 %v269, %v267
    %v314 = vpack.c.b16 %v270, %v268
    %v315 = vpack.c.b16 %v273, %v271
    %v316 = vpack.c.b16 %v274, %v272
    %v317 = vpack.c.b16 %v277, %v275
    %v318 = vpack.c.b16 %v278, %v276
    %v319 = vpack.c.b16 %v281, %v279
    %v320 = vpack.c.b16 %v282, %v280
    %v321 = vpack.c.b16 %v285, %v283
    %v322 = vpack.c.b16 %v286, %v284
    %v323 = vpack.c.b16 %v289, %v287
    %v324 = vpack.c.b16 %v290, %v288
    %v325 = vpack.c.b16 %v293, %v291
    %v326 = vpack.c.b16 %v294, %v292
    %359 = vmatprep.subr.bf16.mxu0 %v296
    %360 = vmatpush1.bf16.msra.mxu0 %v295
    %361 = vmatprep.subr.bf16.mxu0 %v298
    %362 = vmatpush1.bf16.msra.mxu0 %v297
    %363 = vmatprep.subr.bf16.mxu0 %v300
    %364 = vmatpush1.bf16.msra.mxu0 %v299
    %365 = vmatprep.subr.bf16.mxu0 %v302
    %366 = vmatpush1.bf16.msra.mxu0 %v301
    %367 = vmatprep.subr.bf16.mxu0 %v304
    %368 = vmatpush1.bf16.msra.mxu0 %v303
    %369 = vmatprep.subr.bf16.mxu0 %v306
    %370 = vmatpush1.bf16.msra.mxu0 %v305
    %371 = vmatprep.subr.bf16.mxu0 %v308
    %372 = vmatpush1.bf16.msra.mxu0 %v307
    %373 = vmatprep.subr.bf16.mxu0 %v310
    %374 = vmatpush1.bf16.msra.mxu0 %v309
    %375 = vmatprep.subr.bf16.mxu0 %v312
    %376 = vmatpush1.bf16.msra.mxu0 %v311
    %377 = vmatprep.subr.bf16.mxu0 %v314
    %378 = vmatpush1.bf16.msra.mxu0 %v313
    %379 = vmatprep.subr.bf16.mxu0 %v316
    %380 = vmatpush1.bf16.msra.mxu0 %v315
    %381 = vmatprep.subr.bf16.mxu0 %v318
    %382 = vmatpush1.bf16.msra.mxu0 %v317
    %383 = vmatprep.subr.bf16.mxu0 %v320
    %384 = vmatpush1.bf16.msra.mxu0 %v319
    %385 = vmatprep.subr.bf16.mxu0 %v322
    %386 = vmatpush1.bf16.msra.mxu0 %v321
    %387 = vmatprep.subr.bf16.mxu0 %v324
    %388 = vmatpush1.bf16.msra.mxu0 %v323
    %389 = vmatprep.subr.bf16.mxu0 %v326
    %390 = vmatpush1.bf16.msra.mxu0 %v325
    %391 = vmatprep.mubr.bf16.mxu0 %v154
    %392 = vmatmul.mubr.bf16.gmra.mrb[0].mxu0 %v153
    %v393 = vpop.f32.mrb[0].mxu0
    %v394 = vadd.f32 %v192, %v393
    %v395 = vpop.f32.mrb[0].mxu0
    %v396 = vadd.f32 %v196, %v395
    %v397 = vpop.f32.mrb[0].mxu0
    %v398 = vpop.f32.mrb[0].mxu0
    %399 = vdwg.mxu0
    %v400 = vmax.f32 %v394, 0.0
    %v401 = vmax.f32 %v396, 0.0
    %v402 = vld [vmem:[%s5] sm:$0x3]
    %v404 = vlaneseq
    %v405 = vshrl.u32 %v404, 7
    %v406 = vsub.s32 0, %v405
    %v407 = vrot.slane %v402, %v406
    %v408 = vlaneseq
    %v409 = vshrl.u32 %v408, 7
    %v410 = vsub.s32 1, %v409
    %v411 = vrot.slane %v402, %v410
    %v414 = vmul.f32 %v400, %v407
    %v415 = vmul.f32 %v401, %v411
    %v416 = vadd.f32 %v414, %v415
    %417 = vadd.xlane.f32.xlu0 %v416
    %v418 = vpop.xlane.xlu0 %417
    %v419 = vld [vmem:[#allocation2] sm:$0x1]
    %v421 = vlaneseq
    %v422 = vshrl.u32 %v421, 7
    %v423 = vsub.s32 0, %v422
    %v424 = vrot.slane %v419, %v423
    %v426 = vadd.f32 %v418, %v424
    %vm427 = vcmask 7168
    %428 = vst.msk [vmem:[%s7] sm:$0xff] %vm427, %v426
    // Predicated region
    $region42: #{tpu_custom_call.1} parent=1 // pred_check
      _
    $region43: #{tpu_custom_call.1} parent=1 // pred_check_branch
      %430 = sbr.rel (0) target = $region45
    $region44: #{tpu_custom_call.1} parent=1 // pred_region
      _
    $region45: #{tpu_custom_call.1} parent=1 // pred_fallthru
      _
    // Predicated region
    $region46: #{tpu_custom_call.1} parent=1 // pred_check
      _
    $region47: #{tpu_custom_call.1} parent=1 // pred_check_branch
      %432 = sbr.rel (0) target = $region49
    $region48: #{tpu_custom_call.1} parent=1 // pred_region
      _
    $region49: #{tpu_custom_call.1} parent=1 // pred_fallthru
      _
    %433 = vsyncpa [#allocation4], 1
    %434 = vsyncpa [#allocation6], 1

</llo_original>
